<compile_context>
chip_gen: v6e
topology: v6e:2x2x1
jax: 0.10.0
libtpu: 0.0.40
codegen_flags: <defaults>
</compile_context>

<pallas_src>
import jax
import jax.numpy as jnp
from jax.experimental import pallas as pl
from jax.experimental.pallas import tpu as pltpu

# bit_type: uint8 (observer-style PTQ default)
QMIN = 0.0
QMAX = 255.0
_EPS = float(jnp.finfo(jnp.float32).eps)

# Block sizing: aim for ~4 MiB (f32) blocks; cap TR so the lane-padded
# [TR, 128] param buffer stays small.
_TARGET_BLOCK_ELEMS = 512 * 2048   # ~4 MiB at f32
_MAX_TL = 2048
_MAX_TR = 4096


def _round_up(x, m):
    return ((x + m - 1) // m) * m


def _fake_quant_kernel(x_ref, params_ref, o_ref):
    """quant -> dequant on one [TR, TL] tile.

    x_ref:      [TR, TL] input tile (any float dtype, upcast to f32 here)
    params_ref: [TR, 4]  per-row packed params: [inv_scale, scale, zp, pad]
    o_ref:      [TR, TL] fake-quantized output (input dtype)
    """
    x = x_ref[...].astype(jnp.float32)
    p = params_ref[...]                       # (TR, 4) f32
    inv_s = p[:, 0:1]                         # (TR, 1) -> broadcasts over lanes
    s = p[:, 1:2]
    zp = p[:, 2:3]
    q = jnp.clip(jnp.round(x * inv_s + zp), QMIN, QMAX)   # quant
    o_ref[...] = ((q - zp) * s).astype(o_ref.dtype)       # dequantize


def base_quantizer_forward(x_nchw, scale=None, zero_point=None):
    """BaseQuantizer forward (quant + dequantize) on an NCHW tensor.

    If `scale` / `zero_point` ([C] per-channel) are provided (frozen PTQ
    observer), the in-call MinMax observer reduction (one extra full HBM read
    pass) is skipped entirely.
    """
    n, c, h, w = x_nchw.shape
    in_dtype = x_nchw.dtype

    # --- observer / parameter setup (plain-JAX glue, C-sized tensors) ---
    if scale is None or zero_point is None:
        # min/max commute with the exact upcast, so reduce in the input dtype.
        min_c = jnp.minimum(jnp.min(x_nchw, axis=(0, 2, 3)).astype(jnp.float32), 0.0)
        max_c = jnp.maximum(jnp.max(x_nchw, axis=(0, 2, 3)).astype(jnp.float32), 0.0)
        scale_c = jnp.maximum((max_c - min_c) / (QMAX - QMIN), _EPS)       # [C]
        inv_scale_c = 1.0 / scale_c                                        # [C]
        zp_c = jnp.clip(QMIN - jnp.round(min_c * inv_scale_c), QMIN, QMAX)  # [C]
    else:
        scale_c = jnp.asarray(scale, jnp.float32).reshape(c)
        inv_scale_c = 1.0 / scale_c
        zp_c = jnp.asarray(zero_point, jnp.float32).reshape(c)

    # --- layout plumbing: NCHW -> lane-dense [N*C, H*W] slab (a view) ---
    rows, lanes = n * c, h * w
    x2d = x_nchw.reshape(rows, lanes)

    # Packed per-row params [rows, 4]: (inv_scale, scale, zero_point, 0).
    params_c = jnp.stack(
        [inv_scale_c, scale_c, zp_c, jnp.zeros_like(scale_c)], axis=-1)     # [C, 4]
    params = jnp.broadcast_to(params_c[None], (n, c, 4)).reshape(rows, 4)

    # --- block sizing: keep (sub, 128)-aligned blocks; Pallas masks tails ---
    itemsize = jnp.dtype(in_dtype).itemsize
    sub = max(8, 32 // itemsize)                 # f32: 8, bf16: 16, int8: 32
    tl = min(_round_up(lanes, 128), _MAX_TL)
    tr_target = min(_MAX_TR, max(512, _TARGET_BLOCK_ELEMS // tl))
    tr = min(_round_up(rows, sub), _round_up(tr_target, sub))
    grid = (pl.cdiv(rows, tr), pl.cdiv(lanes, tl))

    cost = pl.CostEstimate(
        flops=6 * rows * lanes,
        transcendentals=0,
        bytes_accessed=2 * rows * lanes * itemsize + rows * 4 * 4,
    )

    out2d = pl.pallas_call(
        _fake_quant_kernel,
        out_shape=jax.ShapeDtypeStruct((rows, lanes), in_dtype),
        grid=grid,
        in_specs=[
            pl.BlockSpec((tr, tl), lambda i, j: (i, j)),   # x tile
            pl.BlockSpec((tr, 4), lambda i, j: (i, 0)),    # packed per-row params
            # TODO(synk): on v7x, pipeline_mode=pl.Buffered(3) on the x spec can
            # hide DMA issue latency for another few % if VMEM headroom allows.
        ],
        out_specs=pl.BlockSpec((tr, tl), lambda i, j: (i, j)),
        compiler_params=pltpu.CompilerParams(
            dimension_semantics=("parallel", "parallel"),
            vmem_limit_bytes=40 * 1024 * 1024,
        ),
        cost_estimate=cost,
    )(x2d, params)

    return out2d.reshape(n, c, h, w)


def _reference(x_nchw):
    """Pure-JAX reference of the same forward pass (same inv-scale math)."""
    x = x_nchw.astype(jnp.float32)
    min_c = jnp.minimum(jnp.min(x, axis=(0, 2, 3)), 0.0).reshape(1, -1, 1, 1)
    max_c = jnp.maximum(jnp.max(x, axis=(0, 2, 3)), 0.0).reshape(1, -1, 1, 1)
    scale = jnp.maximum((max_c - min_c) / (QMAX - QMIN), _EPS)
    inv_scale = 1.0 / scale
    zp = jnp.clip(QMIN - jnp.round(min_c * inv_scale), QMIN, QMAX)
    q = jnp.clip(jnp.round(x * inv_scale + zp), QMIN, QMAX)
    return ((q - zp) * scale).astype(x_nchw.dtype)


if __name__ == "__main__":
    key = jax.random.PRNGKey(0)

    # Test 1: lanes (H*W=256) already a multiple of 128 -> fully dense blocks.
    x = jax.random.normal(key, (2, 4, 16, 16), dtype=jnp.float32)
    out = jax.block_until_ready(base_quantizer_forward(x))
    ref = _reference(x)
    assert out.shape == x.shape and out.dtype == x.dtype
    assert jnp.max(jnp.abs(out - ref)) < 1e-5, "mismatch vs reference (dense path)"

    # Test 2: ragged rows/lanes (6 rows, 196 lanes) -> masked tail blocks,
    # no wrapper-side padding or slicing.
    x2 = jax.random.normal(jax.random.PRNGKey(0), (2, 3, 14, 14), dtype=jnp.float32)
    out2 = jax.block_until_ready(base_quantizer_forward(x2))
    ref2 = _reference(x2)
    assert out2.shape == x2.shape
    assert jnp.max(jnp.abs(out2 - ref2)) < 1e-5, "mismatch vs reference (ragged path)"

    # Test 3: bf16 activations kept narrow in HBM end-to-end.
    x3 = jax.random.normal(jax.random.PRNGKey(1), (2, 3, 14, 14), dtype=jnp.bfloat16)
    out3 = jax.block_until_ready(base_quantizer_forward(x3))
    ref3 = _reference(x3)
    assert out3.shape == x3.shape and out3.dtype == x3.dtype
    assert jnp.max(jnp.abs(out3.astype(jnp.float32) - ref3.astype(jnp.float32))) < 5e-2, \
        "mismatch vs reference (bf16 path)"

    # Test 4: frozen-observer path (precomputed per-channel scale / zero_point).
    min_c = jnp.minimum(jnp.min(x, axis=(0, 2, 3)), 0.0)
    max_c = jnp.maximum(jnp.max(x, axis=(0, 2, 3)), 0.0)
    scale_c = jnp.maximum((max_c - min_c) / (QMAX - QMIN), _EPS)
    zp_c = jnp.clip(QMIN - jnp.round(min_c / scale_c), QMIN, QMAX)
    out4 = jax.block_until_ready(base_quantizer_forward(x, scale=scale_c, zero_point=zp_c))
    assert jnp.max(jnp.abs(out4 - ref)) < 1e-5, "mismatch vs reference (frozen-observer path)"

    print("KERNEL_OK")
</pallas_src>

<mosaic_0001>
module attributes {stable_mosaic.version = 11 : i64} {
  func.func @_fake_quant_kernel(%arg0: i32, %arg1: i32, %arg2: memref<8x256xf32, #tpu.memory_space<vmem>>, %arg3: memref<8x4xf32, #tpu.memory_space<vmem>>, %arg4: memref<8x256xf32, #tpu.memory_space<vmem>>) attributes {dimension_semantics = [#tpu.dimension_semantics<parallel>, #tpu.dimension_semantics<parallel>], iteration_bounds = array<i64: 1, 1>, scalar_prefetch = 0 : i64, scratch_operands = 0 : i64, tpu.core_type = #tpu.core_type<tc>, window_params = [{transform_indices = @transform_0, window_bounds = array<i64: 8, 256>}, {transform_indices = @transform_1, window_bounds = array<i64: 8, 4>}, {transform_indices = @transform_2, window_bounds = array<i64: 8, 256>}]} {
    %c0 = arith.constant 0 : index
    %c0_0 = arith.constant 0 : index
    %0 = vector.load %arg2[%c0, %c0_0] : memref<8x256xf32, #tpu.memory_space<vmem>>, vector<8x256xf32>
    %c0_1 = arith.constant 0 : index
    %c0_2 = arith.constant 0 : index
    %1 = vector.load %arg3[%c0_1, %c0_2] : memref<8x4xf32, #tpu.memory_space<vmem>>, vector<8x4xf32>
    %2 = vector.extract_strided_slice %1 {offsets = [0, 0], sizes = [8, 1], strides = [1, 1]} : vector<8x4xf32> to vector<8x1xf32>
    %3 = vector.extract_strided_slice %1 {offsets = [0, 1], sizes = [8, 1], strides = [1, 1]} : vector<8x4xf32> to vector<8x1xf32>
    %4 = vector.extract_strided_slice %1 {offsets = [0, 2], sizes = [8, 1], strides = [1, 1]} : vector<8x4xf32> to vector<8x1xf32>
    %5 = vector.broadcast %2 : vector<8x1xf32> to vector<8x256xf32>
    %6 = arith.mulf %0, %5 : vector<8x256xf32>
    %7 = vector.broadcast %4 : vector<8x1xf32> to vector<8x256xf32>
    %8 = arith.addf %6, %7 : vector<8x256xf32>
    %9 = math.roundeven %8 : vector<8x256xf32>
    %cst = arith.constant 0.000000e+00 : f32
    %cst_3 = arith.constant 2.550000e+02 : f32
    %10 = vector.broadcast %cst : f32 to vector<8x256xf32>
    %11 = arith.maximumf %10, %9 : vector<8x256xf32>
    %12 = vector.broadcast %cst_3 : f32 to vector<8x256xf32>
    %13 = arith.minimumf %12, %11 : vector<8x256xf32>
    %14 = vector.broadcast %4 : vector<8x1xf32> to vector<8x256xf32>
    %15 = arith.subf %13, %14 : vector<8x256xf32>
    %16 = vector.broadcast %3 : vector<8x1xf32> to vector<8x256xf32>
    %17 = arith.mulf %15, %16 : vector<8x256xf32>
    %c0_4 = arith.constant 0 : index
    %c0_5 = arith.constant 0 : index
    %18 = vector.load %arg4[%c0_4, %c0_5] : memref<8x256xf32, #tpu.memory_space<vmem>>, vector<8x256xf32>
    tpu.vector_store %arg4[%c0_4, %c0_5], %17 {strides = array<i32>} : memref<8x256xf32, #tpu.memory_space<vmem>>, vector<8x256xf32>,
    return
  }
  func.func @transform_0(%arg0: i32, %arg1: i32) -> (i32, i32) {
    %c0_i32 = arith.constant 0 : i32
    return %arg0, %arg1 : i32, i32
  }
  func.func @transform_1(%arg0: i32, %arg1: i32) -> (i32, i32) {
    %c0_i32 = arith.constant 0 : i32
    %c0_i32_0 = arith.constant 0 : i32
    return %arg0, %c0_i32 : i32, i32
  }
  func.func @transform_2(%arg0: i32, %arg1: i32) -> (i32, i32) {
    %c0_i32 = arith.constant 0 : i32
    return %arg0, %arg1 : i32, i32
  }
}

</mosaic_0001>

<llo_original>
// kernel: tpu_custom_call.1
$region0: #{tpu_custom_call.1}
  #allocation0 [shape = 'u32[]', space=smem, size = 0x4, offset = 0x4, fixed_abs, tag = 'smem constant byte address 0x4 - core index']
  #allocation1 [shape = 'u32[144,128]{1,0:T(1,128)}', space=vmem, size = 0x12000, scoped, tag = 'internal scratch']
  %s0 = inlined_call_operand.hbm [shape: f32[8,256], index: 0, kind: input, shape index: {}]
  %s1 = inlined_call_operand.vmem [shape: f32[8,4], index: 1, kind: input, shape index: {}]
  %s2 = inlined_call_operand.hbm [shape: f32[8,256], index: 2, kind: output, shape index: {}]
  %s3 = sld [smem:[#allocation0]]
  $region22: #{tpu_custom_call.1} parent=0
    _
  %s5 = ssub.s32 1, %s3
  %s6 = scalar_select 0, %s5, %s3
  $region1: #{tpu_custom_call.1} parent=0
    #allocation2 [shape = 'u8[8192]{0}', space=vmem, size = 0x2000, scoped, tag = 'input window, operand 0, single buffered']
    #allocation3 [shape = 's32[1]{0}', space=sflag, size = 0x4, scoped, tag = 'scoped memory for tpu_custom_call.1']
    #allocation4 [shape = 's32[1]{0}', space=sflag, size = 0x4, scoped, tag = 'scoped memory for tpu_custom_call.1']
    #allocation5 [shape = 'u8[8192]{0}', space=vmem, size = 0x2000, scoped, tag = 'output window, operand 0, single buffered']
    %7 = vsyncpa [#allocation3], 0
    %8 = vsyncpa [#allocation4], 0
    // Predicated region
    $region2: #{tpu_custom_call.1} parent=1 // pred_check
      _
    $region3: #{tpu_custom_call.1} parent=1 // pred_check_branch
      %10 = sbr.rel (0) target = $region5
    $region4: #{tpu_custom_call.1} parent=1 // pred_region
      %s12 = ssub.s32 256, 256
      %13 = vsyncadd [#allocation3], %s12
      %s15 = sshll.u32 [#allocation2], 4
      %s16 = int_to_ptr.vmem [resolvable:$true] %s15
      %18 = dma.hbm_to_vmem [thread:$0]  %s0, 256, %s16, [#allocation3]
    $region5: #{tpu_custom_call.1} parent=1 // pred_fallthru
      _
    // Predicated region
    $region6: #{tpu_custom_call.1} parent=1 // pred_check
      _
    $region7: #{tpu_custom_call.1} parent=1 // pred_check_branch
      %20 = sbr.rel (0) target = $region9
    $region8: #{tpu_custom_call.1} parent=1 // pred_region
      _
    $region9: #{tpu_custom_call.1} parent=1 // pred_fallthru
      _
    // Predicated region
    $region10: #{tpu_custom_call.1} parent=1 // pred_check
      _
    $region11: #{tpu_custom_call.1} parent=1 // pred_check_branch
      %22 = sbr.rel (0) target = $region13
    $region12: #{tpu_custom_call.1} parent=1 // pred_region
      %23 = dma.done [#allocation3], 256
    $region13: #{tpu_custom_call.1} parent=1 // pred_fallthru
      _
    %v24 = vld [vmem:[#allocation2] sm:$0xff]
    %v25 = vld [vmem:[#allocation2 + $0x8] sm:$0xff]
    %v26 = vld [vmem:[%s1] sm:$0xff]
    %28 = vset.pattern.permute.xlu0 0
    %29 = vperm.xlu0 %28, %v26
    %v30 = vpop.permute.xlu0 %29
    %v32 = vmul.f32 %v24, %v30
    %v33 = vmul.f32 %v25, %v30
    %34 = vset.pattern.permute.xlu0 2
    %35 = vperm.xlu0 %34, %v26
    %v36 = vpop.permute.xlu0 %35
    %v38 = vadd.f32 %v32, %v36
    %v39 = vadd.f32 %v33, %v36
    %v40 = vround.ne.pseudo %v38
    %v41 = vround.ne.pseudo %v39
    %v42 = vmax.f32 %v40, 0.0
    %v43 = vmax.f32 %v41, 0.0
    %v44 = vmin.f32 %v42, 255.0
    %v45 = vmin.f32 %v43, 255.0
    %v46 = vsub.f32 %v44, %v36
    %v47 = vsub.f32 %v45, %v36
    %48 = vset.pattern.permute.xlu0 1
    %49 = vperm.xlu0 %48, %v26
    %v50 = vpop.permute.xlu0 %49
    %v52 = vmul.f32 %v46, %v50
    %v53 = vmul.f32 %v47, %v50
    %54 = vst [vmem:[#allocation5] sm:$0xff] %v52
    %55 = vst [vmem:[#allocation5 + $0x8] sm:$0xff] %v53
    // Predicated region
    $region14: #{tpu_custom_call.1} parent=1 // pred_check
      _
    $region15: #{tpu_custom_call.1} parent=1 // pred_check_branch
      %57 = sbr.rel (0) target = $region17
    $region16: #{tpu_custom_call.1} parent=1 // pred_region
      %s59 = ssub.s32 256, 256
      %60 = vsyncadd [#allocation4], %s59
      %s62 = sshll.u32 [#allocation5], 4
      %s63 = int_to_ptr.vmem [resolvable:$true] %s62
      %65 = dma.vmem_to_hbm [thread:$0]  %s63, 256, %s2, [#allocation4]
    $region17: #{tpu_custom_call.1} parent=1 // pred_fallthru
      _
    // Predicated region
    $region18: #{tpu_custom_call.1} parent=1 // pred_check
      _
    $region19: #{tpu_custom_call.1} parent=1 // pred_check_branch
      %67 = sbr.rel (0) target = $region21
    $region20: #{tpu_custom_call.1} parent=1 // pred_region
      %68 = dma.done [#allocation4], 256
    $region21: #{tpu_custom_call.1} parent=1 // pred_fallthru
      _
    %69 = vsyncpa [#allocation3], 1
    %70 = vsyncpa [#allocation4], 1

</llo_original>
